<compile_context>
chip_gen: v6e
topology: v6e:2x2x1
jax: 0.10.0
libtpu: 0.0.40
codegen_flags: <defaults>
</compile_context>

<pallas_src>
import jax
import jax.numpy as jnp
from jax.experimental import pallas as pl
from jax.experimental.pallas import tpu as pltpu

_MIB = 1024 * 1024
# ~8 MiB blocks -> 4*block (in+out, double-buffered) = ~32 MiB working set.
_TARGET_BLOCK_BYTES = 8 * _MIB
_VMEM_CAP = 48 * _MIB  # below v7x's 64 MiB physical VMEM per TensorCore


def _copy_kernel(x_ref, o_ref):
    # Pure tile copy (identity); purely HBM-bandwidth bound.
    o_ref[...] = x_ref[...]


def _sublane_packing(dtype) -> int:
    # 8 for 4-byte dtypes, 16 for 2-byte, 32 for 1-byte.
    itemsize = jnp.dtype(dtype).itemsize
    return max(8, 32 // max(itemsize, 1))


def view_pallas(x, o: int, *, force_copy: bool = False, donate: bool = False):
    """Equivalent of torch View(o): returns x.view(-1, o).

    Default path is the zero-cost metadata reshape (faithful .view
    semantics).  Set force_copy=True to materialize the result through a
    bandwidth-optimal Pallas copy kernel.
    """
    total = x.size
    assert total % o == 0, f"cannot view {x.shape} as (-1, {o})"
    n_rows = total // o
    itemsize = jnp.dtype(x.dtype).itemsize
    packing = _sublane_packing(x.dtype)

    # --- Fast path: .view is metadata-only; never launch a kernel unless the
    #     caller explicitly asks for a physical copy. ---
    if not force_copy:
        return jnp.reshape(x, (n_rows, o))

    # --- Lane-dense flat layout (rows, W): W is the largest multiple of 128
    #     (<= 2048) that divides the element count. ---
    W = None
    for cand in (2048, 1024, 512, 256, 128):
        if total % cand == 0:
            W = cand
            break
    if W is None:
        # No lane-dense layout exists: a copy would degrade every store to a
        # masked vst.msk partial store (the dominant measured lane-layout
        # penalty).  The metadata reshape is strictly better.
        return jnp.reshape(x, (n_rows, o))

    rows = total // W
    x_flat = jnp.reshape(x, (rows, W))  # metadata-only

    # --- Row tile: ~8 MiB per block, sublane-aligned. ---
    tr = max(1, _TARGET_BLOCK_BYTES // (W * itemsize))
    tr = min(tr, rows)
    if tr < rows:
        # Round down to the sublane packing factor; avoids tr%8 != 0.
        tr = max(packing, (tr // packing) * packing)

    # Ensure >= 2 grid steps when there is enough work so the "parallel"
    # row axis can be sharded across both TensorCores on v7x (no-op on
    # single-TC v5e/v6e beyond one extra ~0.35 us grid step).
    if rows >= 2 * packing:
        half = (rows // 2 // packing) * packing
        tr = min(tr, half)
    tr = min(tr, rows)

    # Prefer a tr that divides rows evenly (no ragged, masked last block);
    # search downward in packing-sized steps within ~25% of the target.
    if 0 < tr < rows and rows % tr != 0:
        lo = max(packing, (int(tr * 0.75) // packing) * packing)
        t = (tr // packing) * packing
        while t >= lo:
            if rows % t == 0:
                tr = t
                break
            t -= packing

    grid = (pl.cdiv(rows, tr),)
    block_bytes = tr * W * itemsize
    # True double-buffered footprint is 4*block (in + out, 2 buffers each);
    # add slack, raise above v5e's 16 MiB scoped default, cap under v7x's
    # 64 MiB physical VMEM.
    vmem_limit = min(_VMEM_CAP, max(16 * _MIB, 4 * block_bytes + 2 * _MIB))

    extra_kwargs = {}
    if donate:
        # Same shape/dtype in and out -> safe to alias when caller donates x.
        extra_kwargs["input_output_aliases"] = {0: 0}

    out_flat = pl.pallas_call(
        _copy_kernel,
        out_shape=jax.ShapeDtypeStruct((rows, W), x.dtype),
        grid_spec=pltpu.PrefetchScalarGridSpec(
            num_scalar_prefetch=0,
            grid=grid,
            in_specs=[pl.BlockSpec((tr, W), lambda i: (i, 0))],
            out_specs=pl.BlockSpec((tr, W), lambda i: (i, 0)),
        ),
        compiler_params=pltpu.CompilerParams(
            dimension_semantics=("parallel",),
            vmem_limit_bytes=vmem_limit,
        ),
        cost_estimate=pl.CostEstimate(
            flops=0,
            transcendentals=0,
            bytes_accessed=2 * total * itemsize,
        ),
        **extra_kwargs,
    )(x_flat)

    # Metadata-only reshape to the torch .view(-1, o) result shape.
    return jnp.reshape(out_flat, (n_rows, o))


if __name__ == "__main__":
    key = jax.random.PRNGKey(0)
    # NCHW input, small shapes: batch=2, channels=4, spatial=16x16.
    x = jax.random.normal(key, (2, 4, 16, 16), dtype=jnp.float32)
    o = 64  # View(o=64): 2*4*16*16 = 2048 elements -> (32, 64)

    ref = jnp.reshape(x, (-1, o))

    # 1) Default fast path: metadata-only reshape (faithful .view semantics).
    y_fast = jax.block_until_ready(view_pallas(x, o))
    assert y_fast.shape == (x.size // o, o) and y_fast.dtype == x.dtype
    assert bool(jnp.array_equal(y_fast, ref))

    # 2) Forced-copy path: exercises the Pallas bandwidth-optimal copy kernel.
    y = jax.block_until_ready(view_pallas(x, o, force_copy=True))
    assert y.shape == (x.size // o, o) and y.dtype == x.dtype
    assert bool(jnp.array_equal(y, ref))

    print("KERNEL_OK")
</pallas_src>

<mosaic_0001>
module attributes {stable_mosaic.version = 11 : i64} {
  func.func @_copy_kernel(%arg0: i32, %arg1: memref<1x2048xf32, #tpu.memory_space<vmem>>, %arg2: memref<1x2048xf32, #tpu.memory_space<vmem>>) attributes {dimension_semantics = [#tpu.dimension_semantics<parallel>], iteration_bounds = array<i64: 1>, scalar_prefetch = 0 : i64, scratch_operands = 0 : i64, tpu.core_type = #tpu.core_type<tc>, window_params = [{transform_indices = @transform_0, window_bounds = array<i64: 1, 2048>}, {transform_indices = @transform_1, window_bounds = array<i64: 1, 2048>}]} {
    %c0 = arith.constant 0 : index
    %c0_0 = arith.constant 0 : index
    %0 = vector.load %arg1[%c0, %c0_0] : memref<1x2048xf32, #tpu.memory_space<vmem>>, vector<1x2048xf32>
    %c0_1 = arith.constant 0 : index
    %c0_2 = arith.constant 0 : index
    %1 = vector.load %arg2[%c0_1, %c0_2] : memref<1x2048xf32, #tpu.memory_space<vmem>>, vector<1x2048xf32>
    tpu.vector_store %arg2[%c0_1, %c0_2], %0 {strides = array<i32>} : memref<1x2048xf32, #tpu.memory_space<vmem>>, vector<1x2048xf32>,
    return
  }
  func.func @transform_0(%arg0: i32) -> (i32, i32) {
    %c0_i32 = arith.constant 0 : i32
    %c0_i32_0 = arith.constant 0 : i32
    return %arg0, %c0_i32 : i32, i32
  }
  func.func @transform_1(%arg0: i32) -> (i32, i32) {
    %c0_i32 = arith.constant 0 : i32
    %c0_i32_0 = arith.constant 0 : i32
    return %arg0, %c0_i32 : i32, i32
  }
}

</mosaic_0001>

<llo_original>
// kernel: tpu_custom_call.1
$region0: #{tpu_custom_call.1}
  #allocation0 [shape = 'u32[]', space=smem, size = 0x4, offset = 0x4, fixed_abs, tag = 'smem constant byte address 0x4 - core index']
  #allocation1 [shape = 'u32[144,128]{1,0:T(1,128)}', space=vmem, size = 0x12000, scoped, tag = 'internal scratch']
  %s0 = inlined_call_operand.hbm [shape: f32[1,2048], index: 0, kind: input, shape index: {}]
  %s1 = inlined_call_operand.hbm [shape: f32[1,2048], index: 1, kind: output, shape index: {}]
  %s2 = sld [smem:[#allocation0]]
  $region18: #{tpu_custom_call.1} parent=0
    _
  %s4 = ssub.s32 1, %s2
  %s5 = scalar_select 0, %s4, %s2
  $region1: #{tpu_custom_call.1} parent=0
    #allocation2 [shape = 'u8[8192]{0}', space=vmem, size = 0x2000, scoped, tag = 'input window, operand 0, single buffered']
    #allocation3 [shape = 's32[1]{0}', space=sflag, size = 0x4, scoped, tag = 'scoped memory for tpu_custom_call.1']
    #allocation4 [shape = 's32[1]{0}', space=sflag, size = 0x4, scoped, tag = 'scoped memory for tpu_custom_call.1']
    #allocation5 [shape = 'u8[8192]{0}', space=vmem, size = 0x2000, scoped, tag = 'output window, operand 0, single buffered']
    %6 = vsyncpa [#allocation3], 0
    %7 = vsyncpa [#allocation4], 0
    // Predicated region
    $region2: #{tpu_custom_call.1} parent=1 // pred_check
      _
    $region3: #{tpu_custom_call.1} parent=1 // pred_check_branch
      %9 = sbr.rel (0) target = $region5
    $region4: #{tpu_custom_call.1} parent=1 // pred_region
      %s11 = ssub.s32 256, 256
      %12 = vsyncadd [#allocation3], %s11
      %s14 = sshll.u32 [#allocation2], 4
      %s15 = int_to_ptr.vmem [resolvable:$true] %s14
      %17 = dma.hbm_to_vmem [thread:$0]  %s0, 256, %s15, [#allocation3]
    $region5: #{tpu_custom_call.1} parent=1 // pred_fallthru
      _
    // Predicated region
    $region6: #{tpu_custom_call.1} parent=1 // pred_check
      _
    $region7: #{tpu_custom_call.1} parent=1 // pred_check_branch
      %19 = sbr.rel (0) target = $region9
    $region8: #{tpu_custom_call.1} parent=1 // pred_region
      %20 = dma.done [#allocation3], 256
    $region9: #{tpu_custom_call.1} parent=1 // pred_fallthru
      _
    %v21 = vld [vmem:[#allocation2] sm:$0xff]
    %v22 = vld [vmem:[#allocation2 + $0x8] sm:$0xff]
    %23 = vst [vmem:[#allocation5] sm:$0xff] %v21
    %24 = vst [vmem:[#allocation5 + $0x8] sm:$0xff] %v22
    // Predicated region
    $region10: #{tpu_custom_call.1} parent=1 // pred_check
      _
    $region11: #{tpu_custom_call.1} parent=1 // pred_check_branch
      %26 = sbr.rel (0) target = $region13
    $region12: #{tpu_custom_call.1} parent=1 // pred_region
      %s28 = ssub.s32 256, 256
      %29 = vsyncadd [#allocation4], %s28
      %s31 = sshll.u32 [#allocation5], 4
      %s32 = int_to_ptr.vmem [resolvable:$true] %s31
      %34 = dma.vmem_to_hbm [thread:$0]  %s32, 256, %s1, [#allocation4]
    $region13: #{tpu_custom_call.1} parent=1 // pred_fallthru
      _
    // Predicated region
    $region14: #{tpu_custom_call.1} parent=1 // pred_check
      _
    $region15: #{tpu_custom_call.1} parent=1 // pred_check_branch
      %36 = sbr.rel (0) target = $region17
    $region16: #{tpu_custom_call.1} parent=1 // pred_region
      %37 = dma.done [#allocation4], 256
    $region17: #{tpu_custom_call.1} parent=1 // pred_fallthru
      _
    %38 = vsyncpa [#allocation3], 1
    %39 = vsyncpa [#allocation4], 1

</llo_original>
